<compile_context>
chip_gen: v7x
topology: tpu7x:2x2x1
jax: 0.10.0
libtpu: 0.0.40
codegen_flags: <defaults>
</compile_context>

<pallas_src>
import functools

import jax
import jax.numpy as jnp
from jax.experimental import pallas as pl
from jax.experimental.pallas import tpu as pltpu


def _focal_loss_kernel(x_ref, t_ref, out_ref, *, alpha, gamma, ignore_index,
                       total_pixels, tile_p, inner_tiles, needs_pixel_mask):
    # x_ref:   (C, tile_p) logits, classes on sublanes, pixels on lanes
    # t_ref:   (1, tile_p) int32 targets
    # out_ref: (1, tile_p) f32 per-lane partial sums (resident across the
    #          trailing pixel_inner grid axis)
    pi = pl.program_id(2)

    @pl.when(pi == 0)
    def _():
        out_ref[...] = jnp.zeros_like(out_ref)

    x = x_ref[...].astype(jnp.float32)          # (C, tile_p)
    t = t_ref[...]                              # (1, tile_p)

    # log-softmax over the class (sublane) axis -- no full softmax divide
    m = jnp.max(x, axis=0, keepdims=True)                                  # (1, tile_p)
    lse = jnp.log(jnp.sum(jnp.exp(x - m), axis=0, keepdims=True))          # (1, tile_p)

    # gather x_t = x[target, pixel] via a one-hot select over sublanes
    cls = jax.lax.broadcasted_iota(jnp.int32, x.shape, 0)                  # (C, tile_p)
    x_t = jnp.sum(jnp.where(cls == t, x, 0.0), axis=0, keepdims=True)      # (1, tile_p)

    log_p_t = (x_t - m) - lse                                              # (1, tile_p)
    p_t = jnp.exp(log_p_t)

    w = 1.0 - p_t
    if gamma == 2.0:
        focal = w * w                       # exact, no EUP pow, no NaN path
    elif float(gamma).is_integer() and gamma >= 0:
        focal = jnp.ones_like(w)
        for _ in range(int(gamma)):
            focal = focal * w
    else:
        focal = jnp.maximum(w, 0.0) ** gamma

    loss = (-alpha) * focal * log_p_t                                      # (1, tile_p)

    # Mask with a select (NOT a multiply):
    #   * targets equal to ignore_index contribute 0,
    #   * lanes past the true pixel count (ragged last tile / clamped duplicate
    #     tail blocks of the pixel_outer split) contribute 0, even if the
    #     garbage data produced inf/NaN upstream.
    mask = t != ignore_index
    if needs_pixel_mask:
        po = pl.program_id(1)
        start = (po * inner_tiles + pi) * tile_p
        lane = jax.lax.broadcasted_iota(jnp.int32, t.shape, 1)
        mask = jnp.logical_and(mask, (start + lane) < total_pixels)

    out_ref[...] += jnp.where(mask, loss, 0.0)


def focal_loss(inputs, targets, *, alpha=1.0, gamma=2.0, ignore_index=0,
               tile_pixels=16384):
    """inputs: (N, C, H, W) float; targets: (N, H, W) int. Returns scalar mean
    loss (mean over ALL elements, matching `loss.mean()` in the PyTorch module)."""
    N, C, H, W = inputs.shape
    P = H * W
    R = N * P

    # ---- generation-aware VMEM budget -------------------------------------
    try:
        phys_vmem = int(pltpu.get_tpu_info().vmem_capacity_bytes)
    except Exception:  # pragma: no cover - conservative fallback
        phys_vmem = 64 * 1024 * 1024
    # v7x has 64 MiB physical VMEM -> cap the f32 working tile at ~4 MiB;
    # v5e/v6e (128 MiB) can take ~8 MiB per tile with vmem_limit_bytes raised.
    per_tile_budget = (4 << 20) if phys_vmem <= (64 << 20) else (8 << 20)

    # Lane tile: multiple of 128, as big as budget/request allows, never larger
    # than the (rounded-up) pixel count.
    max_tile = max(128, (per_tile_budget // (C * 4)) // 128 * 128)
    want = max(128, (int(tile_pixels) // 128) * 128)
    tile_p = max(128, min(want, max_tile, pl.cdiv(P, 128) * 128))

    n_tiles = pl.cdiv(P, tile_p)

    # Split the pixel-tile axis into (outer, inner) so v7x's two TensorCores
    # always have a parallel axis with work, even at N == 1.  Inner is the
    # trailing "arbitrary" reduction axis.
    p_outer = 2 if n_tiles >= 2 else 1
    p_inner = pl.cdiv(n_tiles, p_outer)
    needs_pixel_mask = (p_outer * p_inner * tile_p) != P

    # Free reshapes (no transpose, no padding, no extra HBM pass).
    x3d = inputs.reshape(N, C, P)
    t3d = targets.astype(jnp.int32).reshape(N, 1, P)

    def pix_block(n, po, pi):
        # Clamp tail blocks of the (outer, inner) split that fall past the last
        # real pixel block; their contribution is zeroed by the in-kernel lane
        # mask, so re-reading the last block is harmless.
        blk = jnp.minimum(po * p_inner + pi, n_tiles - 1)
        return (n, 0, blk)

    grid = (N, p_outer, p_inner)

    kernel = functools.partial(
        _focal_loss_kernel, alpha=float(alpha), gamma=float(gamma),
        ignore_index=int(ignore_index), total_pixels=int(P),
        tile_p=int(tile_p), inner_tiles=int(p_inner),
        needs_pixel_mask=bool(needs_pixel_mask),
    )

    # Explicit scoped-VMEM limit: double-buffered inputs + targets, the
    # resident accumulator block, and headroom for in-kernel f32 temporaries.
    in_tile_bytes = C * tile_p * int(jnp.dtype(inputs.dtype).itemsize)
    f32_tile_bytes = C * tile_p * 4
    est_vmem = (2 * (in_tile_bytes + tile_p * 4)
                + 2 * tile_p * 4
                + 4 * f32_tile_bytes)
    vmem_limit = int(min(phys_vmem * 3 // 4, max(32 << 20, 2 * est_vmem)))

    partials = pl.pallas_call(
        kernel,
        out_shape=jax.ShapeDtypeStruct((N, p_outer, 1, tile_p), jnp.float32),
        grid_spec=pltpu.PrefetchScalarGridSpec(
            num_scalar_prefetch=0,
            grid=grid,
            in_specs=[
                pl.BlockSpec((None, C, tile_p), pix_block),
                pl.BlockSpec((None, 1, tile_p), pix_block),
            ],
            # Same block across the inner pixel axis -> resident accumulator
            # per (batch, outer-pixel-split) pair.
            out_specs=pl.BlockSpec((None, None, 1, tile_p),
                                   lambda n, po, pi: (n, po, 0, 0)),
        ),
        compiler_params=pltpu.CompilerParams(
            dimension_semantics=("parallel", "parallel", "arbitrary"),
            vmem_limit_bytes=vmem_limit,
        ),
    )(x3d, t3d)

    total = jnp.sum(partials)
    return (total / jnp.float32(R)).astype(jnp.float32)


def _focal_loss_ref(inputs, targets, *, alpha=1.0, gamma=2.0, ignore_index=0):
    p = jax.nn.softmax(inputs.astype(jnp.float32), axis=1)
    p_t = jnp.take_along_axis(p, targets[:, None, :, :].astype(jnp.int32), axis=1)[:, 0]
    mask = (targets != ignore_index).astype(jnp.float32)
    loss = -alpha * (1.0 - p_t) ** gamma * jnp.log(p_t) * mask
    return jnp.mean(loss)


if __name__ == "__main__":
    key = jax.random.PRNGKey(0)
    k1, k2, k3, k4 = jax.random.split(key, 4)

    # Case 1: small, lane-aligned shape (matches the module's typical NCHW use).
    N, C, H, W = 2, 4, 16, 16
    inputs = jax.random.normal(k1, (N, C, H, W), dtype=jnp.float32)
    targets = jax.random.randint(k2, (N, H, W), 0, C, dtype=jnp.int32)
    out = jax.block_until_ready(focal_loss(inputs, targets, alpha=1.0, gamma=2.0, ignore_index=0))
    ref = _focal_loss_ref(inputs, targets, alpha=1.0, gamma=2.0, ignore_index=0)
    assert jnp.allclose(out, ref, rtol=1e-5, atol=1e-6), (out, ref)

    # Case 2: ragged pixel count (H*W not a multiple of 128), odd number of
    # pixel tiles, N == 1 -- exercises the no-pad in-kernel lane mask and the
    # clamped duplicate tail block of the (pixel_outer, pixel_inner) split.
    N2, C2, H2, W2 = 1, 6, 17, 17
    inputs2 = jax.random.normal(k3, (N2, C2, H2, W2), dtype=jnp.float32)
    targets2 = jax.random.randint(k4, (N2, H2, W2), 0, C2, dtype=jnp.int32)
    out2 = jax.block_until_ready(focal_loss(inputs2, targets2, tile_pixels=128))
    ref2 = _focal_loss_ref(inputs2, targets2)
    assert jnp.allclose(out2, ref2, rtol=1e-5, atol=1e-6), (out2, ref2)

    print("KERNEL_OK")
</pallas_src>

<mosaic_0001>
module attributes {stable_mosaic.version = 11 : i64} {
  func.func @_focal_loss_kernel(%arg0: i32, %arg1: i32, %arg2: i32, %arg3: memref<1x4x256xf32, #tpu.memory_space<vmem>>, %arg4: memref<1x1x256xi32, #tpu.memory_space<vmem>>, %arg5: memref<1x1x1x256xf32, #tpu.memory_space<vmem>>) attributes {dimension_semantics = [#tpu.dimension_semantics<parallel>, #tpu.dimension_semantics<parallel>, #tpu.dimension_semantics<arbitrary>], iteration_bounds = array<i64: 2, 1, 1>, scalar_prefetch = 0 : i64, scratch_operands = 0 : i64, tpu.core_type = #tpu.core_type<tc>, window_params = [{transform_indices = @transform_0, window_bounds = array<i64: 1, 4, 256>}, {transform_indices = @transform_1, window_bounds = array<i64: 1, 1, 256>}, {transform_indices = @transform_2, window_bounds = array<i64: 1, 1, 1, 256>}]} {
    %c0_i32 = arith.constant 0 : i32
    %0 = arith.cmpi eq, %arg2, %c0_i32 : i32
    %1 = arith.extui %0 : i1 to i32
    %c0_i32_0 = arith.constant 0 : i32
    %2 = arith.cmpi ne, %1, %c0_i32_0 : i32
    scf.if %2 {
      %cst_21 = arith.constant 0.000000e+00 : f32
      %41 = vector.broadcast %cst_21 : f32 to vector<1x256xf32>
      %c0_22 = arith.constant 0 : index
      %c0_23 = arith.constant 0 : index
      %c0_24 = arith.constant 0 : index
      %c0_25 = arith.constant 0 : index
      %42 = vector.load %arg5[%c0_22, %c0_23, %c0_24, %c0_25] : memref<1x1x1x256xf32, #tpu.memory_space<vmem>>, vector<1x1x1x256xf32>
      %43 = vector.shape_cast %42 : vector<1x1x1x256xf32> to vector<1x256xf32>
      %44 = vector.shape_cast %41 : vector<1x256xf32> to vector<1x1x1x256xf32>
      tpu.vector_store %arg5[%c0_22, %c0_23, %c0_24, %c0_25], %44 {strides = array<i32>} : memref<1x1x1x256xf32, #tpu.memory_space<vmem>>, vector<1x1x1x256xf32>,
    } else {
    }
    %c0 = arith.constant 0 : index
    %c0_1 = arith.constant 0 : index
    %c0_2 = arith.constant 0 : index
    %3 = vector.load %arg3[%c0, %c0_1, %c0_2] : memref<1x4x256xf32, #tpu.memory_space<vmem>>, vector<1x4x256xf32>
    %4 = vector.shape_cast %3 : vector<1x4x256xf32> to vector<4x256xf32>
    %c0_3 = arith.constant 0 : index
    %c0_4 = arith.constant 0 : index
    %c0_5 = arith.constant 0 : index
    %5 = vector.load %arg4[%c0_3, %c0_4, %c0_5] : memref<1x1x256xi32, #tpu.memory_space<vmem>>, vector<1x1x256xi32>
    %6 = vector.shape_cast %5 : vector<1x1x256xi32> to vector<1x256xi32>
    %cst = arith.constant dense<0xFF800000> : vector<256xf32>
    %7 = vector.multi_reduction <maximumf>, %4, %cst [0] : vector<4x256xf32> to vector<256xf32>
    %8 = vector.shape_cast %7 : vector<256xf32> to vector<1x256xf32>
    %9 = vector.broadcast %8 : vector<1x256xf32> to vector<4x256xf32>
    %10 = arith.subf %4, %9 : vector<4x256xf32>
    %11 = math.exp %10 : vector<4x256xf32>
    %cst_6 = arith.constant dense<0.000000e+00> : vector<256xf32>
    %12 = vector.multi_reduction <add>, %11, %cst_6 [0] : vector<4x256xf32> to vector<256xf32>
    %13 = vector.shape_cast %12 : vector<256xf32> to vector<1x256xf32>
    %14 = math.log %13 : vector<1x256xf32>
    %15 = tpu.iota {dimensions = array<i32: 0>} : vector<4x256xi32>
    %16 = vector.broadcast %6 : vector<1x256xi32> to vector<4x256xi32>
    %17 = arith.cmpi eq, %15, %16 : vector<4x256xi32>
    %cst_7 = arith.constant 0.000000e+00 : f32
    %18 = vector.broadcast %cst_7 : f32 to vector<4x256xf32>
    %19 = arith.select %17, %4, %18 : vector<4x256xi1>, vector<4x256xf32>
    %cst_8 = arith.constant dense<0.000000e+00> : vector<256xf32>
    %20 = vector.multi_reduction <add>, %19, %cst_8 [0] : vector<4x256xf32> to vector<256xf32>
    %21 = vector.shape_cast %20 : vector<256xf32> to vector<1x256xf32>
    %22 = arith.subf %21, %8 : vector<1x256xf32>
    %23 = arith.subf %22, %14 : vector<1x256xf32>
    %24 = math.exp %23 : vector<1x256xf32>
    %cst_9 = arith.constant 1.000000e+00 : f32
    %25 = vector.broadcast %cst_9 : f32 to vector<1x256xf32>
    %26 = arith.subf %25, %24 : vector<1x256xf32>
    %27 = arith.mulf %26, %26 : vector<1x256xf32>
    %cst_10 = arith.constant -1.000000e+00 : f32
    %28 = vector.broadcast %cst_10 : f32 to vector<1x256xf32>
    %29 = arith.mulf %28, %27 : vector<1x256xf32>
    %30 = arith.mulf %29, %23 : vector<1x256xf32>
    %c0_i32_11 = arith.constant 0 : i32
    %31 = vector.broadcast %c0_i32_11 : i32 to vector<1x256xi32>
    %32 = arith.cmpi ne, %6, %31 : vector<1x256xi32>
    %c0_12 = arith.constant 0 : index
    %c0_13 = arith.constant 0 : index
    %c0_14 = arith.constant 0 : index
    %c0_15 = arith.constant 0 : index
    %33 = vector.load %arg5[%c0_12, %c0_13, %c0_14, %c0_15] : memref<1x1x1x256xf32, #tpu.memory_space<vmem>>, vector<1x1x1x256xf32>
    %34 = vector.shape_cast %33 : vector<1x1x1x256xf32> to vector<1x256xf32>
    %cst_16 = arith.constant 0.000000e+00 : f32
    %35 = vector.broadcast %cst_16 : f32 to vector<1x256xf32>
    %36 = arith.select %32, %30, %35 : vector<1x256xi1>, vector<1x256xf32>
    %37 = arith.addf %34, %36 : vector<1x256xf32>
    %c0_17 = arith.constant 0 : index
    %c0_18 = arith.constant 0 : index
    %c0_19 = arith.constant 0 : index
    %c0_20 = arith.constant 0 : index
    %38 = vector.load %arg5[%c0_17, %c0_18, %c0_19, %c0_20] : memref<1x1x1x256xf32, #tpu.memory_space<vmem>>, vector<1x1x1x256xf32>
    %39 = vector.shape_cast %38 : vector<1x1x1x256xf32> to vector<1x256xf32>
    %40 = vector.shape_cast %37 : vector<1x256xf32> to vector<1x1x1x256xf32>
    tpu.vector_store %arg5[%c0_17, %c0_18, %c0_19, %c0_20], %40 {strides = array<i32>} : memref<1x1x1x256xf32, #tpu.memory_space<vmem>>, vector<1x1x1x256xf32>,
    return
  }
  func.func @transform_0(%arg0: i32, %arg1: i32, %arg2: i32) -> (i32, i32, i32) {
    %c1_i32 = arith.constant 1 : i32
    %0 = arith.muli %arg1, %c1_i32 : i32
    %1 = arith.addi %0, %arg2 : i32
    %c0_i32 = arith.constant 0 : i32
    %2 = arith.minsi %1, %c0_i32 : i32
    %c0_i32_0 = arith.constant 0 : i32
    %c0_i32_1 = arith.constant 0 : i32
    return %arg0, %c0_i32_0, %2 : i32, i32, i32
  }
  func.func @transform_1(%arg0: i32, %arg1: i32, %arg2: i32) -> (i32, i32, i32) {
    %c1_i32 = arith.constant 1 : i32
    %0 = arith.muli %arg1, %c1_i32 : i32
    %1 = arith.addi %0, %arg2 : i32
    %c0_i32 = arith.constant 0 : i32
    %2 = arith.minsi %1, %c0_i32 : i32
    %c0_i32_0 = arith.constant 0 : i32
    %c0_i32_1 = arith.constant 0 : i32
    return %arg0, %c0_i32_0, %2 : i32, i32, i32
  }
  func.func @transform_2(%arg0: i32, %arg1: i32, %arg2: i32) -> (i32, i32, i32, i32) {
    %c0_i32 = arith.constant 0 : i32
    %c0_i32_0 = arith.constant 0 : i32
    %c0_i32_1 = arith.constant 0 : i32
    return %arg0, %arg1, %c0_i32, %c0_i32_0 : i32, i32, i32, i32
  }
}

</mosaic_0001>

<llo_original>
// kernel: tpu_custom_call.1
$region0: #{tpu_custom_call.1}
  #allocation0 [shape = 'u32[]', space=smem, size = 0x4, offset = 0x4, fixed_abs, tag = 'smem constant byte address 0x4 - core index']
  #allocation1 [shape = 'u32[144,128]{1,0:T(1,128)}', space=vmem, size = 0x12000, scoped, tag = 'internal scratch']
  %s0 = inlined_call_operand.hbm [shape: f32[2,4,256], index: 0, kind: input, shape index: {}]
  %s1 = inlined_call_operand.hbm [shape: s32[2,1,256], index: 1, kind: input, shape index: {}]
  %s2 = inlined_call_operand.hbm [shape: f32[2,1,1,256], index: 2, kind: output, shape index: {}]
  %s3 = sld [smem:[#allocation0]]
  $region53: #{tpu_custom_call.1} parent=0
    _
  %s5 = ssub.s32 1, %s3
  %s6 = scalar_select 0, %s5, %s3
  $region1: #{tpu_custom_call.1} parent=0
    #allocation2 [shape = 'u8[8192]{0}', space=vmem, size = 0x2000, scoped, tag = 'input window, operand 0']
    #allocation3 [shape = 's32[2]{0}', space=sflag, size = 0x8, scoped, tag = 'scoped memory for tpu_custom_call.1']
    #allocation4 [shape = 's32[2]{0}', space=sflag, size = 0x8, scoped, tag = 'scoped memory for tpu_custom_call.1']
    #allocation5 [shape = 'u8[2048]{0}', space=vmem, size = 0x800, scoped, tag = 'input window, operand 1']
    #allocation6 [shape = 's32[2]{0}', space=sflag, size = 0x8, scoped, tag = 'scoped memory for tpu_custom_call.1']
    #allocation7 [shape = 'u8[2048]{0}', space=vmem, size = 0x800, scoped, tag = 'output window, operand 0']
    %7 = vsyncpa [#allocation3], 0
    %s8 = scalar_lea.sflag [#allocation3], 1
    %9 = vsyncpa %s8, 0
    %10 = vsyncpa [#allocation6], 0
    %s11 = scalar_lea.sflag [#allocation6], 1
    %12 = vsyncpa %s11, 0
    %13 = vsyncpa [#allocation4], 0
    %s14 = scalar_lea.sflag [#allocation4], 1
    %15 = vsyncpa %s14, 0
    loop: start=0, step=1, limit=4
    $region2: #{tpu_custom_call.1} parent=1 // loop_pre_header
      _
    $region3: #{tpu_custom_call.1} parent=1 // loop_header
      %s17 = sphi 0, %s21
      %p18 = scmp.ge.s32.totalorder %s17, 4
      %s24 = sphi 0, %s43
      %s25 = sphi 0, %s39
      %s26 = sphi 0, %s35
      %s27 = sphi 0, %s24
      %s28 = sphi 0, %s25
      %s29 = sphi 0, %s26
      %s30 = sphi 0, %s27
      %s31 = sphi 0, %s28
      %s32 = sphi 0, %s29
      %s54 = sphi 0, %s56
      %s57 = sphi 0, %s54
      %s58 = sphi 0, %s57
      %s74 = sphi 0, %s58
      %s88 = sphi 0, %s90
      %s91 = sphi 0, %s88
      %s92 = sphi 0, %s91
      %s108 = sphi 0, %s92
      %s116 = sphi 0, %s118
      %s119 = sphi 0, %s116
      %s120 = sphi 0, %s119
      %s136 = sphi 0, %s120
    $region4: #{tpu_custom_call.1} parent=1 // loop_header_branch
      %20 = sbr.rel (%p18) target = $region8
    $region5: #{tpu_custom_call.1} parent=1 // loop_body
      %s22 = ssub.s32 %s17, 1
      %s23 = ssub.s32 %s17, 2
      %s33 = sadd.s32 1, %s26
      %p34 = scmp.ge.s32.totalorder %s33, 1
      %s35 = scalar_select %p34, 0, %s33
      %s36 = sadd.s32 1, %s25
      %s37 = scalar_select %p34, %s36, %s25
      %p38 = scmp.ge.s32.totalorder %s37, 1
      %s39 = scalar_select %p38, 0, %s37
      %s40 = sadd.s32 1, %s24
      %s41 = scalar_select %p38, %s40, %s24
      %p42 = scmp.ge.s32.totalorder %s41, 2
      %s43 = scalar_select %p42, 0, %s41
      %s44 = sadd.s32 %s25, %s26
      %p45 = scmp.lt.s32.totalorder %s44, 0
      %s46 = scalar_select %p45, %s44, 0
      %s47 = sadd.s32 %s39, %s35
      %p48 = scmp.lt.s32.totalorder %s47, 0
      %s49 = scalar_select %p48, %s47, 0
      %s50 = ssub.s32 %s24, %s43
      %s51 = ssub.s32 %s46, %s49
      %s52 = sor.u32 %s50, %s51
      %p53 = scmp.eq.s32.totalorder %s52, 0
      %s55 = sadd.s32 %s54, 1
      %s56 = scalar_select %p53, %s54, %s55
      %p59 = pneg %p53
      %p60 = scmp.eq.s32.totalorder %s17, 1
      %p61 = por %p59, %p60
      %p62 = scmp.ne.s32.totalorder %s54, %s57
      %p63 = scmp.eq.s32.totalorder %s17, 0
      %p64 = por %p62, %p63
      %p65 = scmp.ne.s32.totalorder %s54, %s57
      %p66 = scmp.eq.s32.totalorder %s22, 1
      %p67 = por %p65, %p66
      %p68 = scmp.ne.s32.totalorder %s57, %s58
      %p69 = scmp.eq.s32.totalorder %s22, 0
      %p70 = por %p68, %p69
      %p71 = scmp.ne.s32.totalorder %s57, %s58
      %p72 = scmp.eq.s32.totalorder %s23, 1
      %p73 = por %p71, %p72
      %p75 = scmp.ne.s32.totalorder %s58, %s74
      %p76 = scmp.eq.s32.totalorder %s23, 0
      %p77 = por %p75, %p76
      %s78 = sadd.s32 %s25, %s26
      %p79 = scmp.lt.s32.totalorder %s78, 0
      %s80 = scalar_select %p79, %s78, 0
      %s81 = sadd.s32 %s39, %s35
      %p82 = scmp.lt.s32.totalorder %s81, 0
      %s83 = scalar_select %p82, %s81, 0
      %s84 = ssub.s32 %s24, %s43
      %s85 = ssub.s32 %s80, %s83
      %s86 = sor.u32 %s84, %s85
      %p87 = scmp.eq.s32.totalorder %s86, 0
      %s89 = sadd.s32 %s88, 1
      %s90 = scalar_select %p87, %s88, %s89
      %p93 = pneg %p87
      %p94 = scmp.eq.s32.totalorder %s17, 1
      %p95 = por %p93, %p94
      %p96 = scmp.ne.s32.totalorder %s88, %s91
      %p97 = scmp.eq.s32.totalorder %s17, 0
      %p98 = por %p96, %p97
      %p99 = scmp.ne.s32.totalorder %s88, %s91
      %p100 = scmp.eq.s32.totalorder %s22, 1
      %p101 = por %p99, %p100
      %p102 = scmp.ne.s32.totalorder %s91, %s92
      %p103 = scmp.eq.s32.totalorder %s22, 0
      %p104 = por %p102, %p103
      %p105 = scmp.ne.s32.totalorder %s91, %s92
      %p106 = scmp.eq.s32.totalorder %s23, 1
      %p107 = por %p105, %p106
      %p109 = scmp.ne.s32.totalorder %s92, %s108
      %p110 = scmp.eq.s32.totalorder %s23, 0
      %p111 = por %p109, %p110
      %s112 = ssub.s32 %s24, %s43
      %s113 = ssub.s32 %s25, %s39
      %s114 = sor.u32 %s112, %s113
      %p115 = scmp.eq.s32.totalorder %s114, 0
      %s117 = sadd.s32 %s116, 1
      %s118 = scalar_select %p115, %s116, %s117
      %p121 = pneg %p115
      %p122 = scmp.eq.s32.totalorder %s17, 1
      %p123 = por %p121, %p122
      %p124 = scmp.ne.s32.totalorder %s116, %s119
      %p125 = scmp.eq.s32.totalorder %s17, 0
      %p126 = por %p124, %p125
      %p127 = scmp.ne.s32.totalorder %s116, %s119
      %p128 = scmp.eq.s32.totalorder %s22, 1
      %p129 = por %p127, %p128
      %p130 = scmp.ne.s32.totalorder %s119, %s120
      %p131 = scmp.eq.s32.totalorder %s22, 0
      %p132 = por %p130, %p131
      %p133 = scmp.ne.s32.totalorder %s119, %s120
      %p134 = scmp.eq.s32.totalorder %s23, 1
      %p135 = por %p133, %p134
      %p137 = scmp.ne.s32.totalorder %s120, %s136
      %p138 = scmp.eq.s32.totalorder %s23, 0
      %p139 = por %p137, %p138
      %p140 = scmp.le.s32.totalorder 1, %s17
      %p141 = scmp.lt.s32.totalorder %s17, 3
      %p142 = pnand %p140, %p141
      %p143 = pneg %p142
      // Predicated region
      $region9: #{tpu_custom_call.1} parent=5 // pred_check
        _
      $region10: #{tpu_custom_call.1} parent=5 // pred_check_branch
        %145 = sbr.rel (%p142) target = $region12
      $region11: #{tpu_custom_call.1} parent=5 // pred_region
        %s146 = ssub.s32 %s17, 1
      $region12: #{tpu_custom_call.1} parent=5 // pred_fallthru
        _
      %p147 = scmp.lt.s32.totalorder %s17, 2
      // Predicated region
      $region13: #{tpu_custom_call.1} parent=5 // pred_check
        %p148 = pneg %p147
      $region14: #{tpu_custom_call.1} parent=5 // pred_check_branch
        %150 = sbr.rel (%p148) target = $region16
      $region15: #{tpu_custom_call.1} parent=5 // pred_region
        // Predicated region
        $region17: #{tpu_custom_call.1} parent=15 // pred_check
          %p151 = pneg %p64
        $region18: #{tpu_custom_call.1} parent=15 // pred_check_branch
          %153 = sbr.rel (%p151) target = $region20
        $region19: #{tpu_custom_call.1} parent=15 // pred_region
          %s154 = sand.u32 %s54, 1
          %s155 = scalar_lea.sflag [#allocation3], %s154
          %s156 = sand.u32 %s54, 1
          %s157 = smul.addr %s156, 8
          %s158 = scalar_lea.vmem [#allocation2], %s157
          %s159 = sadd.s32 %s25, %s26
          %p160 = scmp.lt.s32.totalorder %s159, 0
          %s161 = scalar_select %p160, %s159, 0
          %s162 = smul.u32 2, %s161
          %s164 = ssub.s32 128, 128
          %165 = vsyncadd %s155, %s164
          %s166 = smul.addr %s24, 2
          %s167 = sadd.s32 %s162, %s166
          %s168 = smul.addr %s167, 64
          %s169 = scalar_lea.hbm %s0, %s168
          %s171 = sshll.u32 %s158, 4
          %s172 = int_to_ptr.vmem [resolvable:$true] %s171
          %174 = dma.hbm_to_vmem [thread:$0]  %s169, 128, %s172, %s155
        $region20: #{tpu_custom_call.1} parent=15 // pred_fallthru
          _
        // Predicated region
        $region21: #{tpu_custom_call.1} parent=15 // pred_check
          %p175 = pneg %p98
        $region22: #{tpu_custom_call.1} parent=15 // pred_check_branch
          %177 = sbr.rel (%p175) target = $region24
        $region23: #{tpu_custom_call.1} parent=15 // pred_region
          %s178 = sand.u32 %s88, 1
          %s179 = scalar_lea.sflag [#allocation6], %s178
          %s180 = sand.u32 %s88, 1
          %s181 = smul.addr %s180, 2
          %s182 = scalar_lea.vmem [#allocation5], %s181
          %s183 = sadd.s32 %s25, %s26
          %p184 = scmp.lt.s32.totalorder %s183, 0
          %s185 = scalar_select %p184, %s183, 0
          %s186 = smul.u32 2, %s185
          %s188 = ssub.s32 32, 32
          %189 = vsyncadd %s179, %s188
          %s190 = smul.addr %s24, 2
          %s191 = sadd.s32 %s186, %s190
          %s192 = smul.addr %s191, 16
          %s193 = scalar_lea.hbm %s1, %s192
          %s195 = sshll.u32 %s182, 4
          %s196 = int_to_ptr.vmem [resolvable:$true] %s195
          %198 = dma.hbm_to_vmem [thread:$0]  %s193, 32, %s196, %s179
        $region24: #{tpu_custom_call.1} parent=15 // pred_fallthru
          _
      $region16: #{tpu_custom_call.1} parent=5 // pred_fallthru
        _
      %p199 = scmp.le.s32.totalorder 1, %s17
      %p200 = scmp.lt.s32.totalorder %s17, 3
      %p201 = pnand %p199, %p200
      %p202 = pneg %p201
      // Predicated region
      $region25: #{tpu_custom_call.1} parent=5 // pred_check
        _
      $region26: #{tpu_custom_call.1} parent=5 // pred_check_branch
        %204 = sbr.rel (%p201) target = $region28
      $region27: #{tpu_custom_call.1} parent=5 // pred_region
        %s205 = ssub.s32 %s17, 1
        %s206 = sand.u32 %s57, 1
        %s207 = scalar_lea.sflag [#allocation3], %s206
        %s208 = sand.u32 %s57, 1
        %s209 = smul.addr %s208, 8
        %s210 = scalar_lea.vmem [#allocation2], %s209
        // Predicated region
        $region29: #{tpu_custom_call.1} parent=27 // pred_check
          %p211 = pneg %p70
        $region30: #{tpu_custom_call.1} parent=27 // pred_check_branch
          %213 = sbr.rel (%p211) target = $region32
        $region31: #{tpu_custom_call.1} parent=27 // pred_region
          %214 = dma.done %s207, 128
        $region32: #{tpu_custom_call.1} parent=27 // pred_fallthru
          _
        %s215 = sand.u32 %s91, 1
        %s216 = scalar_lea.sflag [#allocation6], %s215
        %s217 = sand.u32 %s91, 1
        %s218 = smul.addr %s217, 2
        %s219 = scalar_lea.vmem [#allocation5], %s218
        // Predicated region
        $region33: #{tpu_custom_call.1} parent=27 // pred_check
          %p220 = pneg %p104
        $region34: #{tpu_custom_call.1} parent=27 // pred_check_branch
          %222 = sbr.rel (%p220) target = $region36
        $region35: #{tpu_custom_call.1} parent=27 // pred_region
          %223 = dma.done %s216, 32
        $region36: #{tpu_custom_call.1} parent=27 // pred_fallthru
          _
        %s224 = sand.u32 %s57, 1
        %s225 = scalar_lea.sflag [#allocation3], %s224
        %s226 = sand.u32 %s57, 1
        %s227 = smul.addr %s226, 8
        %s228 = scalar_lea.vmem [#allocation2], %s227
        %p229 = pneg %p70
        %p230 = pneg %p67
        %s231 = sand.u32 %s91, 1
        %s232 = scalar_lea.sflag [#allocation6], %s231
        %s233 = sand.u32 %s91, 1
        %s234 = smul.addr %s233, 2
        %s235 = scalar_lea.vmem [#allocation5], %s234
        %p236 = pneg %p104
        %p237 = pneg %p101
        %p238 = pneg %p132
        %p239 = pneg %p129
        %s240 = sand.u32 %s119, 1
        %s241 = scalar_lea.sflag [#allocation4], %s240
        %s242 = sand.u32 %s119, 1
        %s243 = smul.addr %s242, 2
        %s244 = scalar_lea.vmem [#allocation7], %s243
        %s245 = sadd.s32 %s28, %s29
        %p246 = scmp.lt.s32.totalorder %s245, 0
        %s247 = scalar_select %p246, %s245, 0
        %s248 = smul.u32 2, %s247
        %s249 = sadd.s32 %s28, %s29
        %p250 = scmp.lt.s32.totalorder %s249, 0
        %s251 = scalar_select %p250, %s249, 0
        %s252 = smul.u32 2, %s251
        %p253 = scmp.eq.s32.totalorder %s29, 0
        // Predicated region
        $region37: #{tpu_custom_call.1} parent=27 // pred_check
          %p254 = pneg %p253
        $region38: #{tpu_custom_call.1} parent=27 // pred_check_branch
          %256 = sbr.rel (%p254) target = $region40
        $region39: #{tpu_custom_call.1} parent=27 // pred_region
          %v257 = vlaneseq
          %vm258 = vcmp.ge.s32.totalorder %v257, 0
          %vm259 = vcmp.lt.s32.totalorder %v257, 256
          %vm260 = vmand %vm258, %vm259
          %261 = vst.msk [vmem:[%s244] sm:$0x3] %vm260, 0.0
        $region40: #{tpu_custom_call.1} parent=27 // pred_fallthru
          _
        %v262 = vld [vmem:[%s210] sm:$0xff]
        %v263 = vld [vmem:[%s219] sm:$0x3]
        %v265 = vcombine.high %v262, %v262
        %vm267 = vcmask 1043456
        %v268 = vsel %vm267, %v262, -inf
        %v269 = vrot.slane %v268, 4
        %v270 = vmax.f32 %v268, %v269
        %v271 = vrot.slane %v270, 2
        %v272 = vmax.f32 %v270, %v271
        %v273 = vrot.slane %v272, 1
        %v274 = vmax.f32 %v272, %v273
        %v275 = vsel %vm267, %v265, -inf
        %v276 = vrot.slane %v275, 4
        %v277 = vmax.f32 %v275, %v276
        %v278 = vrot.slane %v277, 2
        %v279 = vmax.f32 %v277, %v278
        %v280 = vrot.slane %v279, 1
        %v281 = vmax.f32 %v279, %v280
        %v284 = vcombine.low %v274, %v281
        %v286 = vsub.f32 %v262, %v284
        %v287 = vmul.f32 %v286, 1.442695
        %v288 = vpow.pop %v287
        %v290 = vcombine.high %v288, %v288
        %v292 = vsel %vm267, %v288, 0.0
        %v293 = vrot.slane %v292, 4
        %v294 = vadd.f32 %v292, %v293
        %v295 = vrot.slane %v294, 2
        %v296 = vadd.f32 %v294, %v295
        %v297 = vrot.slane %v296, 1
        %v298 = vadd.f32 %v296, %v297
        %v299 = vsel %vm267, %v290, 0.0
        %v300 = vrot.slane %v299, 4
        %v301 = vadd.f32 %v299, %v300
        %v302 = vrot.slane %v301, 2
        %v303 = vadd.f32 %v301, %v302
        %v304 = vrot.slane %v303, 1
        %v305 = vadd.f32 %v303, %v304
        %v306 = vlog2.pop %v298
        %v307 = vmul.f32 %v306, 0.6931472
        %v308 = vlog2.pop %v305
        %v309 = vmul.f32 %v308, 0.6931472
        %v310 = vlaneseq
        %v311 = vshrl.u32 %v310, 7
        %v312 = vlaneseq
        %v313 = vshrl.u32 %v312, 7
        %v314 = vsub.s32 0, %v313
        %v315 = vrot.slane %v263, %v314
        %v316 = vlaneseq
        %v317 = vshrl.u32 %v316, 7
        %v318 = vsub.s32 1, %v317
        %v319 = vrot.slane %v263, %v318
        %vm320 = vcmp.eq.s32.totalorder %v311, %v315
        %vm321 = vcmp.eq.s32.totalorder %v311, %v319
        %v322 = vsel %vm320, %v262, 0.0
        %v323 = vsel %vm321, %v265, 0.0
        %v324 = vsel %vm267, %v322, 0.0
        %v325 = vrot.slane %v324, 4
        %v326 = vadd.f32 %v324, %v325
        %v327 = vrot.slane %v326, 2
        %v328 = vadd.f32 %v326, %v327
        %v329 = vrot.slane %v328, 1
        %v330 = vadd.f32 %v328, %v329
        %v331 = vsel %vm267, %v323, 0.0
        %v332 = vrot.slane %v331, 4
        %v333 = vadd.f32 %v331, %v332
        %v334 = vrot.slane %v333, 2
        %v335 = vadd.f32 %v333, %v334
        %v336 = vrot.slane %v335, 1
        %v337 = vadd.f32 %v335, %v336
        %v338 = vsub.f32 %v330, %v274
        %v339 = vsub.f32 %v337, %v281
        %v340 = vsub.f32 %v338, %v307
        %v341 = vsub.f32 %v339, %v309
        %v342 = vmul.f32 %v340, 1.442695
        %v343 = vpow.pop %v342
        %v344 = vmul.f32 %v341, 1.442695
        %v345 = vpow.pop %v344
        %v346 = vsub.f32 1.0, %v343
        %v347 = vsub.f32 1.0, %v345
        %v348 = vmul.f32 %v346, %v346
        %v349 = vmul.f32 %v347, %v347
        %v350 = vmul.f32 %v348, -1.0
        %v351 = vmul.f32 %v349, -1.0
        %v352 = vmul.f32 %v350, %v340
        %v353 = vmul.f32 %v351, %v341
        %vm354 = vcmp.ne.s32.totalorder %v263, 0
        %v355 = vld [vmem:[%s244] sm:$0x3]
        %v358 = vcombine.low %v352, %v353
        %v360 = vunpack.c.l.s4 1966171168
        %v361 = vunpack.c.0.s8 %v360
        %v362 = vlaneseq
        %v363 = vshrl.u32 %v362, 7
        %v364 = vsub.s32 %v361, %v363
        %v365 = vrot.slane %v358, %v364
        %v367 = vunpack.c.l.s4 1966171168
        %v368 = vunpack.c.0.s8 %v367
        %v369 = vlaneseq
        %v370 = vshrl.u32 %v369, 7
        %v371 = vsub.s32 %v368, %v370
        %v372 = vrot.slane %v365, %v371
        %v374 = vsel %vm354, %v372, 0.0
        %v375 = vadd.f32 %v355, %v374
        %v376 = vlaneseq
        %vm377 = vcmp.ge.s32.totalorder %v376, 0
        %vm378 = vcmp.lt.s32.totalorder %v376, 256
        %vm379 = vmand %vm377, %vm378
        %380 = vst.msk [vmem:[%s244] sm:$0x3] %vm379, %v375
        %s381 = sand.u32 %s119, 1
        %s382 = scalar_lea.sflag [#allocation4], %s381
        %s383 = sand.u32 %s119, 1
        %s384 = smul.addr %s383, 2
        %s385 = scalar_lea.vmem [#allocation7], %s384
        // Predicated region
        $region41: #{tpu_custom_call.1} parent=27 // pred_check
          %p386 = pneg %p129
        $region42: #{tpu_custom_call.1} parent=27 // pred_check_branch
          %388 = sbr.rel (%p386) target = $region44
        $region43: #{tpu_custom_call.1} parent=27 // pred_region
          %s390 = ssub.s32 32, 32
          %391 = vsyncadd %s382, %s390
          %s392 = smul.addr %s28, 2
          %s393 = smul.addr %s27, 2
          %s394 = sadd.s32 %s392, %s393
          %s395 = smul.addr %s394, 16
          %s396 = scalar_lea.hbm %s2, %s395
          %s398 = sshll.u32 %s385, 4
          %s399 = int_to_ptr.vmem [resolvable:$true] %s398
          %401 = dma.vmem_to_hbm [thread:$0]  %s399, 32, %s396, %s382
        $region44: #{tpu_custom_call.1} parent=27 // pred_fallthru
          _
      $region28: #{tpu_custom_call.1} parent=5 // pred_fallthru
        _
      %p402 = scmp.le.s32.totalorder 2, %s17
      // Predicated region
      $region45: #{tpu_custom_call.1} parent=5 // pred_check
        %p403 = pneg %p402
      $region46: #{tpu_custom_call.1} parent=5 // pred_check_branch
        %405 = sbr.rel (%p403) target = $region48
      $region47: #{tpu_custom_call.1} parent=5 // pred_region
        %s406 = ssub.s32 %s17, 2
        // Predicated region
        $region49: #{tpu_custom_call.1} parent=47 // pred_check
          %p407 = pneg %p135
        $region50: #{tpu_custom_call.1} parent=47 // pred_check_branch
          %409 = sbr.rel (%p407) target = $region52
        $region51: #{tpu_custom_call.1} parent=47 // pred_region
          %s410 = sand.u32 %s120, 1
          %s411 = scalar_lea.sflag [#allocation4], %s410
          %s412 = sand.u32 %s120, 1
          %s413 = smul.addr %s412, 2
          %s414 = scalar_lea.vmem [#allocation7], %s413
          %415 = dma.done %s411, 32
        $region52: #{tpu_custom_call.1} parent=47 // pred_fallthru
          _
      $region48: #{tpu_custom_call.1} parent=5 // pred_fallthru
        _
    $region6: #{tpu_custom_call.1} parent=1 // loop_footer
      %s21 = sadd.s32 1, %s17
    $region7: #{tpu_custom_call.1} parent=1 // loop_footer_branch
      %16 = sbr.rel target = $region3
    $region8: #{tpu_custom_call.1} parent=1 // loop_exit
      _
    %416 = vsyncpa [#allocation3], 1
    %s417 = scalar_lea.sflag [#allocation3], 1
    %418 = vsyncpa %s417, 1
    %419 = vsyncpa [#allocation6], 1
    %s420 = scalar_lea.sflag [#allocation6], 1
    %421 = vsyncpa %s420, 1
    %422 = vsyncpa [#allocation4], 1
    %s423 = scalar_lea.sflag [#allocation4], 1
    %424 = vsyncpa %s423, 1

</llo_original>
